<compile_context>
chip_gen: v7x
topology: tpu7x:2x2x1
jax: 0.10.0
libtpu: 0.0.40
codegen_flags: <defaults>
</compile_context>

<pallas_src>
import functools
import math

import jax
import jax.numpy as jnp
from jax.experimental import pallas as pl
from jax.experimental.pallas import tpu as pltpu

_INV_SQRT_2PI = 1.0 / math.sqrt(2.0 * math.pi)
_INV_SQRT_2 = 1.0 / math.sqrt(2.0)


def _round_up(x, m):
    return ((x + m - 1) // m) * m


def _nr(x):
    """nr(x) = N(x;0,1) + x/2*(1+erf(x/sqrt(2)))  (expected ReLU of a Gaussian), f32 in/out.

    The Gaussian pdf term and the erf polynomial share the same exponential:
    exp(-(x/sqrt(2))^2) == exp(-x^2/2), so it is computed once (one EUP exp per element
    instead of two).  erf uses Abramowitz & Stegun 7.1.26 (max abs err ~1.5e-7); the approx
    reciprocal rides the EUP slot and adds ~1e-3-level error (dominant deviation from the
    f32 reference, well inside the test tolerance).
    """
    e = jnp.exp(-0.5 * jnp.square(x))                    # shared exponential
    a1, a2, a3, a4, a5 = 0.254829592, -0.284496736, 1.421413741, -1.453152027, 1.061405429
    pc = 0.3275911
    ax = jnp.abs(x) * _INV_SQRT_2                        # |x| / sqrt(2)
    t = pl.reciprocal(1.0 + pc * ax, approx=True)
    poly = ((((a5 * t + a4) * t + a3) * t + a2) * t + a1) * t
    erf_abs = 1.0 - poly * e                             # erf(|x|/sqrt(2))
    erf_x = jnp.where(x >= 0.0, erf_abs, -erf_abs)
    return _INV_SQRT_2PI * e + 0.5 * x * (1.0 + erf_x)


def _gmm_linear_kernel(flags_ref, p_ref, x0_ref, mask_ref, rowmiss_ref,
                       w_ref, wsq_ref, b_ref, mean_ref, cov_ref, out_ref,
                       *, n_gmm, row_axis):
    """2-D grid (row tiles x out-column tiles; axis order chosen by the wrapper).

    flags (per row-tile "has missing value") and p (mixture weights) live in SMEM via
    scalar prefetch.  Every grid point writes out_ref exactly once (one of the two whens).
    """
    flag = flags_ref[pl.program_id(row_axis)]

    x0 = x0_ref[...]                     # (TM, Fp) bf16, NaN already replaced by 0 in wrapper
    w = w_ref[...]                       # (Fp, TN) bf16
    b = b_ref[...]                       # (1, TN)  f32

    # fully-observed result: relu(x0 @ W + b)   (needed by both branches)
    y_full = jnp.maximum(
        jnp.dot(x0, w, preferred_element_type=jnp.float32) + b, 0.0)

    @pl.when(flag == 0)
    def _():
        out_ref[...] = y_full            # clean tile: single matmul, single store

    @pl.when(flag != 0)
    def _():
        mask = mask_ref[...]             # (TM, Fp) bf16: 1 where the feature was NaN
        w_sq = wsq_ref[...]              # (Fp, TN) bf16, W*W precomputed in f32 in the wrapper
        means = mean_ref[...]            # (K, Fp)  bf16
        covs = cov_ref[...]              # (K, Fp)  bf16 (abs applied in the wrapper)
        row_missing = rowmiss_ref[...] > 0.0          # (TM, 1) per-row flag from the wrapper

        # Group matmuls by RHS so the MXU keeps each weight latched: all K numerator
        # matmuls against W first, then all K denominator matmuls against W^2.
        # NOTE(v5e): no bf16 VALU there; Mosaic legalizes the bf16 elementwise prep via f32.
        nums = []
        for k in range(n_gmm):           # n_gmm is small and static -> unrolled
            m_k = x0 + mask * means[k:k + 1, :]       # == where(missing, mean_k, x), bf16
            nums.append(jnp.dot(m_k, w, preferred_element_type=jnp.float32) + b)
        den_sqs = []
        for k in range(n_gmm):
            sigma_k = mask * covs[k:k + 1, :]         # variance only where missing, bf16
            den_sqs.append(jnp.dot(sigma_k, w_sq, preferred_element_type=jnp.float32))

        acc = jnp.zeros_like(y_full)
        for k in range(n_gmm):
            den_sq = den_sqs[k]
            # Guard den_sq==0 (fully-observed rows inside a missing tile / all-zero W columns);
            # those rows are overridden by `row_missing` below — matches reference behaviour.
            inv_den = jax.lax.rsqrt(jnp.where(den_sq > 0.0, den_sq, 1.0))
            acc = acc + p_ref[k] * _nr(nums[k] * inv_den)

        out_ref[...] = jnp.where(row_missing, acc, y_full)


def _vmem_capacity_bytes():
    try:
        info = pltpu.get_tpu_info()
        cap = getattr(info, "vmem_capacity_bytes", None)
        if cap:
            return int(cap)
    except Exception:
        pass
    return 64 * 1024 * 1024              # conservative default (v7x per-TC VMEM)


def gmm_linear(x, W, b, gmm_log_weights, gmm_means, gmm_covariances, *,
               tile_m=256, tile_n=512):
    """Pallas forward pass of GMMLinear.  x: (N, F) float32, may contain NaN."""
    N, F = x.shape
    O = W.shape[1]
    K = gmm_means.shape[0]

    # --- padded dims: contraction dim padded to a lane multiple (fully-filled MXU passes) ---
    F_pad = _round_up(F, 128)
    o_pad = _round_up(O, 128)

    # --- generation-aware VMEM budget & tile selection ---
    vmem_budget = min(int(_vmem_capacity_bytes() * 0.75), 100 * 1024 * 1024)

    tm = _round_up(min(tile_m, _round_up(max(N, 1), 8)), 8)
    tn_cap = min(_round_up(tile_n, 128), o_pad)
    tn_candidates = sorted((c for c in range(128, tn_cap + 1, 128) if o_pad % c == 0),
                           reverse=True)

    def footprint(tm_, tn_):
        bf, f4 = 2, 4
        inputs = 2 * (2 * tm_ * F_pad * bf            # x0 + mask (double-buffered)
                      + 2 * F_pad * tn_ * bf          # W + W^2
                      + tm_ * 128 * f4                # row_missing (lane-padded)
                      + 8 * tn_ * f4                  # bias (sublane-padded)
                      + 2 * max(K, 8) * F_pad * bf)   # means + covs
        outputs = 2 * tm_ * tn_ * f4
        temps = (2 * K + 4) * tm_ * tn_ * f4          # y_full / nums / den_sqs / acc
        return inputs + outputs + temps

    tn = tn_candidates[-1]
    for cand in tn_candidates:                        # largest column tile that fits VMEM
        if footprint(tm, cand) <= vmem_budget:
            tn = cand
            break
    while footprint(tm, tn) > vmem_budget and tm > 8:
        tm = _round_up(max(8, tm // 2), 8)

    n_pad = _round_up(N, tm)
    n_m = n_pad // tm
    n_n = o_pad // tn

    # --- grid-invariant prep hoisted out of the kernel ---
    x32 = x.astype(jnp.float32)
    nan_mask = jnp.isnan(x32)
    x0 = jnp.where(nan_mask, 0.0, x32)
    row_missing = jnp.any(nan_mask, axis=1, keepdims=True).astype(jnp.float32)   # (N, 1)

    pad_rows = n_pad - N
    pad_feat = F_pad - F
    x0_bf = jnp.pad(x0, ((0, pad_rows), (0, pad_feat))).astype(jnp.bfloat16)
    mask_bf = jnp.pad(nan_mask.astype(jnp.float32),
                      ((0, pad_rows), (0, pad_feat))).astype(jnp.bfloat16)
    rowmiss_p = jnp.pad(row_missing, ((0, pad_rows), (0, 0)))

    W32 = jnp.pad(W.astype(jnp.float32), ((0, pad_feat), (0, o_pad - O)))
    W_bf = W32.astype(jnp.bfloat16)                     # bf16 MXU inputs (f32 accumulation)
    Wsq_bf = (W32 * W32).astype(jnp.bfloat16)           # W^2 computed once in f32
    b_p = jnp.pad(b.astype(jnp.float32), (0, o_pad - O)).reshape(1, o_pad)
    means_bf = jnp.pad(gmm_means.astype(jnp.float32),
                       ((0, 0), (0, pad_feat))).astype(jnp.bfloat16)
    covs_bf = jnp.pad(jnp.abs(gmm_covariances.astype(jnp.float32)),
                      ((0, 0), (0, pad_feat))).astype(jnp.bfloat16)
    p = jax.nn.softmax(gmm_log_weights.astype(jnp.float32))          # (K,) mixture weights

    # Per row-tile "has missing value" flag, scalar-prefetched into SMEM for @pl.when gating.
    flags = (jnp.max(rowmiss_p.reshape(n_m, tm), axis=1) > 0.0).astype(jnp.int32)

    # --- adaptive grid order: re-stream whichever of {x, weights} costs less HBM traffic ---
    weight_stream_bytes = 2 * F_pad * o_pad * 2          # W + W^2, bf16, full
    x_stream_bytes = 2 * n_pad * F_pad * 2               # x0 + mask, bf16, full
    rows_inner = (n_n > 1) and (n_m * weight_stream_bytes > n_n * x_stream_bytes)
    if rows_inner:
        grid = (n_n, n_m)
        row_axis = 1
        def rc(gi, gj):                                   # grid = (col tile, row tile)
            return gj, gi
    else:
        grid = (n_m, n_n)
        row_axis = 0
        def rc(gi, gj):                                   # grid = (row tile, col tile)
            return gi, gj

    kernel = functools.partial(_gmm_linear_kernel, n_gmm=K, row_axis=row_axis)
    out_p = pl.pallas_call(
        kernel,
        out_shape=jax.ShapeDtypeStruct((n_pad, o_pad), jnp.float32),
        grid_spec=pltpu.PrefetchScalarGridSpec(
            num_scalar_prefetch=2,                        # (flags, p) -> SMEM
            grid=grid,
            in_specs=[
                pl.BlockSpec((tm, F_pad), lambda gi, gj, fl, pw: (rc(gi, gj)[0], 0)),  # x0   bf16
                pl.BlockSpec((tm, F_pad), lambda gi, gj, fl, pw: (rc(gi, gj)[0], 0)),  # mask bf16
                pl.BlockSpec((tm, 1),     lambda gi, gj, fl, pw: (rc(gi, gj)[0], 0)),  # row miss
                pl.BlockSpec((F_pad, tn), lambda gi, gj, fl, pw: (0, rc(gi, gj)[1])),  # W    bf16
                pl.BlockSpec((F_pad, tn), lambda gi, gj, fl, pw: (0, rc(gi, gj)[1])),  # W^2  bf16
                pl.BlockSpec((1, tn),     lambda gi, gj, fl, pw: (0, rc(gi, gj)[1])),  # bias f32
                pl.BlockSpec((K, F_pad),  lambda gi, gj, fl, pw: (0, 0)),              # means
                pl.BlockSpec((K, F_pad),  lambda gi, gj, fl, pw: (0, 0)),              # covs
            ],
            out_specs=pl.BlockSpec((tm, tn), lambda gi, gj, fl, pw: rc(gi, gj)),
        ),
        compiler_params=pltpu.CompilerParams(
            dimension_semantics=("parallel", "parallel"),
            vmem_limit_bytes=vmem_budget,
        ),
    )(flags, p, x0_bf, mask_bf, rowmiss_p, W_bf, Wsq_bf, b_p, means_bf, covs_bf)

    return out_p[:N, :O]


def gmm_linear_reference(x, W, b, gmm_log_weights, gmm_means, gmm_covariances,
                         matmul_dtype=jnp.float32):
    """Pure-JAX reference with identical semantics (uses jax's erf).

    matmul_dtype=bfloat16 mirrors the kernel's MXU input precision (f32 accumulation)."""
    p = jax.nn.softmax(gmm_log_weights)
    nan_mask = jnp.isnan(x)
    row_missing = jnp.any(nan_mask, axis=1, keepdims=True)
    x0 = jnp.where(nan_mask, 0.0, x)
    W_m = W.astype(matmul_dtype)
    Wsq_m = (W * W).astype(matmul_dtype)
    y_full = jnp.maximum(
        jnp.dot(x0.astype(matmul_dtype), W_m, preferred_element_type=jnp.float32) + b[None, :], 0.0)
    acc = jnp.zeros_like(y_full)
    for k in range(gmm_means.shape[0]):
        m = jnp.where(nan_mask, gmm_means[k][None, :], x)
        sigma = jnp.where(nan_mask, jnp.abs(gmm_covariances[k])[None, :], 0.0)
        num = jnp.dot(m.astype(matmul_dtype), W_m, preferred_element_type=jnp.float32) + b[None, :]
        den_sq = jnp.dot(sigma.astype(matmul_dtype), Wsq_m, preferred_element_type=jnp.float32)
        den = jnp.sqrt(jnp.where(den_sq > 0.0, den_sq, 1.0))
        val = num / den
        nr_val = (_INV_SQRT_2PI * jnp.exp(-jnp.square(val) * 0.5)
                  + val * 0.5 * (1.0 + jax.scipy.special.erf(val * _INV_SQRT_2)))
        acc = acc + p[k] * nr_val
    return jnp.where(row_missing, acc, y_full)


if __name__ == "__main__":
    # Small deterministic problem: N=16 samples, in_features=32, out_features=64, 3 GMM components.
    N, F, O, K = 16, 32, 64, 3
    key = jax.random.PRNGKey(0)
    kx, kw, kb, kwt, kmu, kcov = jax.random.split(key, 6)

    x = jax.random.normal(kx, (N, F), dtype=jnp.float32)
    # Inject missing values (NaN) into a few rows.
    x = x.at[1, 3].set(jnp.nan)
    x = x.at[5, 0:10].set(jnp.nan)
    x = x.at[10, 7].set(jnp.nan)
    x = x.at[10, 31].set(jnp.nan)
    x = x.at[13, 20].set(jnp.nan)

    W = jax.random.normal(kw, (F, O), dtype=jnp.float32)
    b = jax.random.normal(kb, (O,), dtype=jnp.float32)

    raw_w = jax.random.uniform(kwt, (K,), dtype=jnp.float32, minval=0.5, maxval=1.5)
    gmm_weights = raw_w / raw_w.sum()
    gmm_log_weights = jnp.log(gmm_weights)                      # module stores log(weights)
    gmm_means = jax.random.normal(kmu, (K, F), dtype=jnp.float32)
    gmm_covariances = jnp.abs(jax.random.normal(kcov, (K, F), dtype=jnp.float32)) + 0.1

    out = gmm_linear(x, W, b, gmm_log_weights, gmm_means, gmm_covariances)
    out = jax.block_until_ready(out)

    # Tight check vs a reference that mirrors the kernel's bf16 MXU inputs (f32 accumulation).
    ref_bf16 = jax.block_until_ready(
        gmm_linear_reference(x, W, b, gmm_log_weights, gmm_means, gmm_covariances,
                             matmul_dtype=jnp.bfloat16))
    # Looser sanity check vs the full-f32 reference (bf16 matmul rounding only).
    ref_f32 = jax.block_until_ready(
        gmm_linear_reference(x, W, b, gmm_log_weights, gmm_means, gmm_covariances,
                             matmul_dtype=jnp.float32))

    assert out.shape == (N, O)
    assert not bool(jnp.any(jnp.isnan(out))), "output contains NaN"
    assert bool(jnp.allclose(out, ref_bf16, rtol=2e-2, atol=2e-2)), "mismatch vs bf16-matmul reference"
    assert bool(jnp.allclose(out, ref_f32, rtol=1e-1, atol=1e-1)), "mismatch vs f32 reference"

    print("KERNEL_OK")
</pallas_src>

<mosaic_0001>
module attributes {stable_mosaic.version = 11 : i64} {
  func.func @_gmm_linear_kernel(%arg0: i32, %arg1: i32, %arg2: memref<1xi32, #tpu.memory_space<smem>>, %arg3: memref<3xf32, #tpu.memory_space<smem>>, %arg4: memref<16x128xbf16, #tpu.memory_space<vmem>>, %arg5: memref<16x128xbf16, #tpu.memory_space<vmem>>, %arg6: memref<16x1xf32, #tpu.memory_space<vmem>>, %arg7: memref<128x128xbf16, #tpu.memory_space<vmem>>, %arg8: memref<128x128xbf16, #tpu.memory_space<vmem>>, %arg9: memref<1x128xf32, #tpu.memory_space<vmem>>, %arg10: memref<3x128xbf16, #tpu.memory_space<vmem>>, %arg11: memref<3x128xbf16, #tpu.memory_space<vmem>>, %arg12: memref<16x128xf32, #tpu.memory_space<vmem>>) attributes {dimension_semantics = [#tpu.dimension_semantics<parallel>, #tpu.dimension_semantics<parallel>], iteration_bounds = array<i64: 1, 1>, scalar_prefetch = 2 : i64, scratch_operands = 0 : i64, tpu.core_type = #tpu.core_type<tc>, window_params = [{transform_indices = @transform_0, window_bounds = array<i64: 16, 128>}, {transform_indices = @transform_1, window_bounds = array<i64: 16, 128>}, {transform_indices = @transform_2, window_bounds = array<i64: 16, 1>}, {transform_indices = @transform_3, window_bounds = array<i64: 128, 128>}, {transform_indices = @transform_4, window_bounds = array<i64: 128, 128>}, {transform_indices = @transform_5, window_bounds = array<i64: 1, 128>}, {pipeline_mode = #tpu.pipeline_mode<synchronous>, transform_indices = @transform_6, window_bounds = array<i64: 3, 128>}, {pipeline_mode = #tpu.pipeline_mode<synchronous>, transform_indices = @transform_7, window_bounds = array<i64: 3, 128>}, {transform_indices = @transform_8, window_bounds = array<i64: 16, 128>}]} {
    %0 = arith.index_cast %arg0 : i32 to index
    %1 = memref.load %arg2[%0] : memref<1xi32, #tpu.memory_space<smem>>
    %c0 = arith.constant 0 : index
    %c0_0 = arith.constant 0 : index
    %2 = vector.load %arg4[%c0, %c0_0] : memref<16x128xbf16, #tpu.memory_space<vmem>>, vector<16x128xbf16>
    %c0_1 = arith.constant 0 : index
    %c0_2 = arith.constant 0 : index
    %3 = vector.load %arg7[%c0_1, %c0_2] : memref<128x128xbf16, #tpu.memory_space<vmem>>, vector<128x128xbf16>
    %c0_3 = arith.constant 0 : index
    %c0_4 = arith.constant 0 : index
    %4 = vector.load %arg9[%c0_3, %c0_4] : memref<1x128xf32, #tpu.memory_space<vmem>>, vector<1x128xf32>
    %cst = arith.constant dense<0.000000e+00> : vector<16x128xf32>
    %5 = tpu.matmul %2, %3, %cst {dimension_numbers = #tpu.dot_dimension_numbers<[1], [0], [0], [1], [0, 0, 1, 1], [], []>} : vector<16x128xbf16>, vector<128x128xbf16>, vector<16x128xf32> -> vector<16x128xf32>
    %6 = vector.broadcast %4 : vector<1x128xf32> to vector<16x128xf32>
    %7 = arith.addf %5, %6 : vector<16x128xf32>
    %cst_5 = arith.constant 0.000000e+00 : f32
    %8 = vector.broadcast %cst_5 : f32 to vector<16x128xf32>
    %9 = arith.maximumf %7, %8 : vector<16x128xf32>
    %c0_i32 = arith.constant 0 : i32
    %10 = arith.cmpi eq, %1, %c0_i32 : i32
    %11 = arith.extui %10 : i1 to i32
    %c0_i32_6 = arith.constant 0 : i32
    %12 = arith.cmpi ne, %11, %c0_i32_6 : i32
    scf.if %12 {
      %c0_9 = arith.constant 0 : index
      %c0_10 = arith.constant 0 : index
      %16 = vector.load %arg12[%c0_9, %c0_10] : memref<16x128xf32, #tpu.memory_space<vmem>>, vector<16x128xf32>
      tpu.vector_store %arg12[%c0_9, %c0_10], %9 {strides = array<i32>} : memref<16x128xf32, #tpu.memory_space<vmem>>, vector<16x128xf32>,
    } else {
    }
    %c0_i32_7 = arith.constant 0 : i32
    %13 = arith.cmpi ne, %1, %c0_i32_7 : i32
    %14 = arith.extui %13 : i1 to i32
    %c0_i32_8 = arith.constant 0 : i32
    %15 = arith.cmpi ne, %14, %c0_i32_8 : i32
    scf.if %15 {
      %c0_9 = arith.constant 0 : index
      %c0_10 = arith.constant 0 : index
      %16 = vector.load %arg5[%c0_9, %c0_10] : memref<16x128xbf16, #tpu.memory_space<vmem>>, vector<16x128xbf16>
      %c0_11 = arith.constant 0 : index
      %c0_12 = arith.constant 0 : index
      %17 = vector.load %arg8[%c0_11, %c0_12] : memref<128x128xbf16, #tpu.memory_space<vmem>>, vector<128x128xbf16>
      %c0_13 = arith.constant 0 : index
      %c0_14 = arith.constant 0 : index
      %18 = vector.load %arg10[%c0_13, %c0_14] : memref<3x128xbf16, #tpu.memory_space<vmem>>, vector<3x128xbf16>
      %c0_15 = arith.constant 0 : index
      %c0_16 = arith.constant 0 : index
      %19 = vector.load %arg11[%c0_15, %c0_16] : memref<3x128xbf16, #tpu.memory_space<vmem>>, vector<3x128xbf16>
      %c0_17 = arith.constant 0 : index
      %c0_18 = arith.constant 0 : index
      %20 = vector.load %arg6[%c0_17, %c0_18] : memref<16x1xf32, #tpu.memory_space<vmem>>, vector<16x1xf32>
      %cst_19 = arith.constant 0.000000e+00 : f32
      %21 = vector.broadcast %cst_19 : f32 to vector<16x1xf32>
      %22 = arith.cmpf ogt, %20, %21 : vector<16x1xf32>
      %23 = vector.extract_strided_slice %18 {offsets = [0, 0], sizes = [1, 128], strides = [1, 1]} : vector<3x128xbf16> to vector<1x128xbf16>
      %24 = vector.broadcast %23 : vector<1x128xbf16> to vector<16x128xbf16>
      %25 = arith.mulf %16, %24 : vector<16x128xbf16>
      %26 = arith.addf %2, %25 : vector<16x128xbf16>
      %cst_20 = arith.constant dense<0.000000e+00> : vector<16x128xf32>
      %27 = tpu.matmul %26, %3, %cst_20 {dimension_numbers = #tpu.dot_dimension_numbers<[1], [0], [0], [1], [0, 0, 1, 1], [], []>} : vector<16x128xbf16>, vector<128x128xbf16>, vector<16x128xf32> -> vector<16x128xf32>
      %28 = vector.broadcast %4 : vector<1x128xf32> to vector<16x128xf32>
      %29 = arith.addf %27, %28 : vector<16x128xf32>
      %30 = vector.extract_strided_slice %18 {offsets = [1, 0], sizes = [1, 128], strides = [1, 1]} : vector<3x128xbf16> to vector<1x128xbf16>
      %31 = vector.broadcast %30 : vector<1x128xbf16> to vector<16x128xbf16>
      %32 = arith.mulf %16, %31 : vector<16x128xbf16>
      %33 = arith.addf %2, %32 : vector<16x128xbf16>
      %cst_21 = arith.constant dense<0.000000e+00> : vector<16x128xf32>
      %34 = tpu.matmul %33, %3, %cst_21 {dimension_numbers = #tpu.dot_dimension_numbers<[1], [0], [0], [1], [0, 0, 1, 1], [], []>} : vector<16x128xbf16>, vector<128x128xbf16>, vector<16x128xf32> -> vector<16x128xf32>
      %35 = vector.broadcast %4 : vector<1x128xf32> to vector<16x128xf32>
      %36 = arith.addf %34, %35 : vector<16x128xf32>
      %37 = vector.extract_strided_slice %18 {offsets = [2, 0], sizes = [1, 128], strides = [1, 1]} : vector<3x128xbf16> to vector<1x128xbf16>
      %38 = vector.broadcast %37 : vector<1x128xbf16> to vector<16x128xbf16>
      %39 = arith.mulf %16, %38 : vector<16x128xbf16>
      %40 = arith.addf %2, %39 : vector<16x128xbf16>
      %cst_22 = arith.constant dense<0.000000e+00> : vector<16x128xf32>
      %41 = tpu.matmul %40, %3, %cst_22 {dimension_numbers = #tpu.dot_dimension_numbers<[1], [0], [0], [1], [0, 0, 1, 1], [], []>} : vector<16x128xbf16>, vector<128x128xbf16>, vector<16x128xf32> -> vector<16x128xf32>
      %42 = vector.broadcast %4 : vector<1x128xf32> to vector<16x128xf32>
      %43 = arith.addf %41, %42 : vector<16x128xf32>
      %44 = vector.extract_strided_slice %19 {offsets = [0, 0], sizes = [1, 128], strides = [1, 1]} : vector<3x128xbf16> to vector<1x128xbf16>
      %45 = vector.broadcast %44 : vector<1x128xbf16> to vector<16x128xbf16>
      %46 = arith.mulf %16, %45 : vector<16x128xbf16>
      %cst_23 = arith.constant dense<0.000000e+00> : vector<16x128xf32>
      %47 = tpu.matmul %46, %17, %cst_23 {dimension_numbers = #tpu.dot_dimension_numbers<[1], [0], [0], [1], [0, 0, 1, 1], [], []>} : vector<16x128xbf16>, vector<128x128xbf16>, vector<16x128xf32> -> vector<16x128xf32>
      %48 = vector.extract_strided_slice %19 {offsets = [1, 0], sizes = [1, 128], strides = [1, 1]} : vector<3x128xbf16> to vector<1x128xbf16>
      %49 = vector.broadcast %48 : vector<1x128xbf16> to vector<16x128xbf16>
      %50 = arith.mulf %16, %49 : vector<16x128xbf16>
      %cst_24 = arith.constant dense<0.000000e+00> : vector<16x128xf32>
      %51 = tpu.matmul %50, %17, %cst_24 {dimension_numbers = #tpu.dot_dimension_numbers<[1], [0], [0], [1], [0, 0, 1, 1], [], []>} : vector<16x128xbf16>, vector<128x128xbf16>, vector<16x128xf32> -> vector<16x128xf32>
      %52 = vector.extract_strided_slice %19 {offsets = [2, 0], sizes = [1, 128], strides = [1, 1]} : vector<3x128xbf16> to vector<1x128xbf16>
      %53 = vector.broadcast %52 : vector<1x128xbf16> to vector<16x128xbf16>
      %54 = arith.mulf %16, %53 : vector<16x128xbf16>
      %cst_25 = arith.constant dense<0.000000e+00> : vector<16x128xf32>
      %55 = tpu.matmul %54, %17, %cst_25 {dimension_numbers = #tpu.dot_dimension_numbers<[1], [0], [0], [1], [0, 0, 1, 1], [], []>} : vector<16x128xbf16>, vector<128x128xbf16>, vector<16x128xf32> -> vector<16x128xf32>
      %cst_26 = arith.constant 0.000000e+00 : f32
      %56 = vector.broadcast %cst_26 : f32 to vector<16x128xf32>
      %cst_27 = arith.constant 0.000000e+00 : f32
      %57 = vector.broadcast %cst_27 : f32 to vector<16x128xf32>
      %58 = arith.cmpf ogt, %47, %57 : vector<16x128xf32>
      %cst_28 = arith.constant 1.000000e+00 : f32
      %59 = vector.broadcast %cst_28 : f32 to vector<16x128xf32>
      %60 = arith.select %58, %47, %59 : vector<16x128xi1>, vector<16x128xf32>
      %61 = math.rsqrt %60 : vector<16x128xf32>
      %c0_29 = arith.constant 0 : index
      %62 = memref.load %arg3[%c0_29] : memref<3xf32, #tpu.memory_space<smem>>
      %63 = arith.mulf %29, %61 : vector<16x128xf32>
      %64 = arith.mulf %63, %63 : vector<16x128xf32>
      %cst_30 = arith.constant -5.000000e-01 : f32
      %65 = vector.broadcast %cst_30 : f32 to vector<16x128xf32>
      %66 = arith.mulf %65, %64 : vector<16x128xf32>
      %67 = math.exp %66 : vector<16x128xf32>
      %68 = math.absf %63 : vector<16x128xf32>
      %cst_31 = arith.constant 0.707106769 : f32
      %69 = vector.broadcast %cst_31 : f32 to vector<16x128xf32>
      %70 = arith.mulf %68, %69 : vector<16x128xf32>
      %cst_32 = arith.constant 0.327591091 : f32
      %71 = vector.broadcast %cst_32 : f32 to vector<16x128xf32>
      %72 = arith.mulf %71, %70 : vector<16x128xf32>
      %cst_33 = arith.constant 1.000000e+00 : f32
      %73 = vector.broadcast %cst_33 : f32 to vector<16x128xf32>
      %74 = arith.addf %73, %72 : vector<16x128xf32>
      %75 = tpu.reciprocal %74 {approx = true} : vector<16x128xf32> -> vector<16x128xf32>
      %cst_34 = arith.constant 1.06140542 : f32
      %76 = vector.broadcast %cst_34 : f32 to vector<16x128xf32>
      %77 = arith.mulf %76, %75 : vector<16x128xf32>
      %cst_35 = arith.constant -1.45315206 : f32
      %78 = vector.broadcast %cst_35 : f32 to vector<16x128xf32>
      %79 = arith.addf %77, %78 : vector<16x128xf32>
      %80 = arith.mulf %79, %75 : vector<16x128xf32>
      %cst_36 = arith.constant 1.42141378 : f32
      %81 = vector.broadcast %cst_36 : f32 to vector<16x128xf32>
      %82 = arith.addf %80, %81 : vector<16x128xf32>
      %83 = arith.mulf %82, %75 : vector<16x128xf32>
      %cst_37 = arith.constant -0.284496725 : f32
      %84 = vector.broadcast %cst_37 : f32 to vector<16x128xf32>
      %85 = arith.addf %83, %84 : vector<16x128xf32>
      %86 = arith.mulf %85, %75 : vector<16x128xf32>
      %cst_38 = arith.constant 0.254829586 : f32
      %87 = vector.broadcast %cst_38 : f32 to vector<16x128xf32>
      %88 = arith.addf %86, %87 : vector<16x128xf32>
      %89 = arith.mulf %88, %75 : vector<16x128xf32>
      %90 = arith.mulf %89, %67 : vector<16x128xf32>
      %cst_39 = arith.constant 1.000000e+00 : f32
      %91 = vector.broadcast %cst_39 : f32 to vector<16x128xf32>
      %92 = arith.subf %91, %90 : vector<16x128xf32>
      %cst_40 = arith.constant 0.000000e+00 : f32
      %93 = vector.broadcast %cst_40 : f32 to vector<16x128xf32>
      %94 = arith.cmpf oge, %63, %93 : vector<16x128xf32>
      %cst_41 = arith.constant 0.000000e+00 : f32
      %95 = vector.broadcast %cst_41 : f32 to vector<16x128xf32>
      %96 = arith.subf %95, %92 : vector<16x128xf32>
      %97 = arith.select %94, %92, %96 : vector<16x128xi1>, vector<16x128xf32>
      %cst_42 = arith.constant 0.398942292 : f32
      %98 = vector.broadcast %cst_42 : f32 to vector<16x128xf32>
      %99 = arith.mulf %98, %67 : vector<16x128xf32>
      %cst_43 = arith.constant 5.000000e-01 : f32
      %100 = vector.broadcast %cst_43 : f32 to vector<16x128xf32>
      %101 = arith.mulf %100, %63 : vector<16x128xf32>
      %cst_44 = arith.constant 1.000000e+00 : f32
      %102 = vector.broadcast %cst_44 : f32 to vector<16x128xf32>
      %103 = arith.addf %102, %97 : vector<16x128xf32>
      %104 = arith.mulf %101, %103 : vector<16x128xf32>
      %105 = arith.addf %99, %104 : vector<16x128xf32>
      %106 = vector.broadcast %62 : f32 to vector<16x128xf32>
      %107 = arith.mulf %106, %105 : vector<16x128xf32>
      %108 = arith.addf %56, %107 : vector<16x128xf32>
      %cst_45 = arith.constant 0.000000e+00 : f32
      %109 = vector.broadcast %cst_45 : f32 to vector<16x128xf32>
      %110 = arith.cmpf ogt, %51, %109 : vector<16x128xf32>
      %cst_46 = arith.constant 1.000000e+00 : f32
      %111 = vector.broadcast %cst_46 : f32 to vector<16x128xf32>
      %112 = arith.select %110, %51, %111 : vector<16x128xi1>, vector<16x128xf32>
      %113 = math.rsqrt %112 : vector<16x128xf32>
      %c1 = arith.constant 1 : index
      %114 = memref.load %arg3[%c1] : memref<3xf32, #tpu.memory_space<smem>>
      %115 = arith.mulf %36, %113 : vector<16x128xf32>
      %116 = arith.mulf %115, %115 : vector<16x128xf32>
      %cst_47 = arith.constant -5.000000e-01 : f32
      %117 = vector.broadcast %cst_47 : f32 to vector<16x128xf32>
      %118 = arith.mulf %117, %116 : vector<16x128xf32>
      %119 = math.exp %118 : vector<16x128xf32>
      %120 = math.absf %115 : vector<16x128xf32>
      %cst_48 = arith.constant 0.707106769 : f32
      %121 = vector.broadcast %cst_48 : f32 to vector<16x128xf32>
      %122 = arith.mulf %120, %121 : vector<16x128xf32>
      %cst_49 = arith.constant 0.327591091 : f32
      %123 = vector.broadcast %cst_49 : f32 to vector<16x128xf32>
      %124 = arith.mulf %123, %122 : vector<16x128xf32>
      %cst_50 = arith.constant 1.000000e+00 : f32
      %125 = vector.broadcast %cst_50 : f32 to vector<16x128xf32>
      %126 = arith.addf %125, %124 : vector<16x128xf32>
      %127 = tpu.reciprocal %126 {approx = true} : vector<16x128xf32> -> vector<16x128xf32>
      %cst_51 = arith.constant 1.06140542 : f32
      %128 = vector.broadcast %cst_51 : f32 to vector<16x128xf32>
      %129 = arith.mulf %128, %127 : vector<16x128xf32>
      %cst_52 = arith.constant -1.45315206 : f32
      %130 = vector.broadcast %cst_52 : f32 to vector<16x128xf32>
      %131 = arith.addf %129, %130 : vector<16x128xf32>
      %132 = arith.mulf %131, %127 : vector<16x128xf32>
      %cst_53 = arith.constant 1.42141378 : f32
      %133 = vector.broadcast %cst_53 : f32 to vector<16x128xf32>
      %134 = arith.addf %132, %133 : vector<16x128xf32>
      %135 = arith.mulf %134, %127 : vector<16x128xf32>
      %cst_54 = arith.constant -0.284496725 : f32
      %136 = vector.broadcast %cst_54 : f32 to vector<16x128xf32>
      %137 = arith.addf %135, %136 : vector<16x128xf32>
      %138 = arith.mulf %137, %127 : vector<16x128xf32>
      %cst_55 = arith.constant 0.254829586 : f32
      %139 = vector.broadcast %cst_55 : f32 to vector<16x128xf32>
      %140 = arith.addf %138, %139 : vector<16x128xf32>
      %141 = arith.mulf %140, %127 : vector<16x128xf32>
      %142 = arith.mulf %141, %119 : vector<16x128xf32>
      %cst_56 = arith.constant 1.000000e+00 : f32
      %143 = vector.broadcast %cst_56 : f32 to vector<16x128xf32>
      %144 = arith.subf %143, %142 : vector<16x128xf32>
      %cst_57 = arith.constant 0.000000e+00 : f32
      %145 = vector.broadcast %cst_57 : f32 to vector<16x128xf32>
      %146 = arith.cmpf oge, %115, %145 : vector<16x128xf32>
      %cst_58 = arith.constant 0.000000e+00 : f32
      %147 = vector.broadcast %cst_58 : f32 to vector<16x128xf32>
      %148 = arith.subf %147, %144 : vector<16x128xf32>
      %149 = arith.select %146, %144, %148 : vector<16x128xi1>, vector<16x128xf32>
      %cst_59 = arith.constant 0.398942292 : f32
      %150 = vector.broadcast %cst_59 : f32 to vector<16x128xf32>
      %151 = arith.mulf %150, %119 : vector<16x128xf32>
      %cst_60 = arith.constant 5.000000e-01 : f32
      %152 = vector.broadcast %cst_60 : f32 to vector<16x128xf32>
      %153 = arith.mulf %152, %115 : vector<16x128xf32>
      %cst_61 = arith.constant 1.000000e+00 : f32
      %154 = vector.broadcast %cst_61 : f32 to vector<16x128xf32>
      %155 = arith.addf %154, %149 : vector<16x128xf32>
      %156 = arith.mulf %153, %155 : vector<16x128xf32>
      %157 = arith.addf %151, %156 : vector<16x128xf32>
      %158 = vector.broadcast %114 : f32 to vector<16x128xf32>
      %159 = arith.mulf %158, %157 : vector<16x128xf32>
      %160 = arith.addf %108, %159 : vector<16x128xf32>
      %cst_62 = arith.constant 0.000000e+00 : f32
      %161 = vector.broadcast %cst_62 : f32 to vector<16x128xf32>
      %162 = arith.cmpf ogt, %55, %161 : vector<16x128xf32>
      %cst_63 = arith.constant 1.000000e+00 : f32
      %163 = vector.broadcast %cst_63 : f32 to vector<16x128xf32>
      %164 = arith.select %162, %55, %163 : vector<16x128xi1>, vector<16x128xf32>
      %165 = math.rsqrt %164 : vector<16x128xf32>
      %c2 = arith.constant 2 : index
      %166 = memref.load %arg3[%c2] : memref<3xf32, #tpu.memory_space<smem>>
      %167 = arith.mulf %43, %165 : vector<16x128xf32>
      %168 = arith.mulf %167, %167 : vector<16x128xf32>
      %cst_64 = arith.constant -5.000000e-01 : f32
      %169 = vector.broadcast %cst_64 : f32 to vector<16x128xf32>
      %170 = arith.mulf %169, %168 : vector<16x128xf32>
      %171 = math.exp %170 : vector<16x128xf32>
      %172 = math.absf %167 : vector<16x128xf32>
      %cst_65 = arith.constant 0.707106769 : f32
      %173 = vector.broadcast %cst_65 : f32 to vector<16x128xf32>
      %174 = arith.mulf %172, %173 : vector<16x128xf32>
      %cst_66 = arith.constant 0.327591091 : f32
      %175 = vector.broadcast %cst_66 : f32 to vector<16x128xf32>
      %176 = arith.mulf %175, %174 : vector<16x128xf32>
      %cst_67 = arith.constant 1.000000e+00 : f32
      %177 = vector.broadcast %cst_67 : f32 to vector<16x128xf32>
      %178 = arith.addf %177, %176 : vector<16x128xf32>
      %179 = tpu.reciprocal %178 {approx = true} : vector<16x128xf32> -> vector<16x128xf32>
      %cst_68 = arith.constant 1.06140542 : f32
      %180 = vector.broadcast %cst_68 : f32 to vector<16x128xf32>
      %181 = arith.mulf %180, %179 : vector<16x128xf32>
      %cst_69 = arith.constant -1.45315206 : f32
      %182 = vector.broadcast %cst_69 : f32 to vector<16x128xf32>
      %183 = arith.addf %181, %182 : vector<16x128xf32>
      %184 = arith.mulf %183, %179 : vector<16x128xf32>
      %cst_70 = arith.constant 1.42141378 : f32
      %185 = vector.broadcast %cst_70 : f32 to vector<16x128xf32>
      %186 = arith.addf %184, %185 : vector<16x128xf32>
      %187 = arith.mulf %186, %179 : vector<16x128xf32>
      %cst_71 = arith.constant -0.284496725 : f32
      %188 = vector.broadcast %cst_71 : f32 to vector<16x128xf32>
      %189 = arith.addf %187, %188 : vector<16x128xf32>
      %190 = arith.mulf %189, %179 : vector<16x128xf32>
      %cst_72 = arith.constant 0.254829586 : f32
      %191 = vector.broadcast %cst_72 : f32 to vector<16x128xf32>
      %192 = arith.addf %190, %191 : vector<16x128xf32>
      %193 = arith.mulf %192, %179 : vector<16x128xf32>
      %194 = arith.mulf %193, %171 : vector<16x128xf32>
      %cst_73 = arith.constant 1.000000e+00 : f32
      %195 = vector.broadcast %cst_73 : f32 to vector<16x128xf32>
      %196 = arith.subf %195, %194 : vector<16x128xf32>
      %cst_74 = arith.constant 0.000000e+00 : f32
      %197 = vector.broadcast %cst_74 : f32 to vector<16x128xf32>
      %198 = arith.cmpf oge, %167, %197 : vector<16x128xf32>
      %cst_75 = arith.constant 0.000000e+00 : f32
      %199 = vector.broadcast %cst_75 : f32 to vector<16x128xf32>
      %200 = arith.subf %199, %196 : vector<16x128xf32>
      %201 = arith.select %198, %196, %200 : vector<16x128xi1>, vector<16x128xf32>
      %cst_76 = arith.constant 0.398942292 : f32
      %202 = vector.broadcast %cst_76 : f32 to vector<16x128xf32>
      %203 = arith.mulf %202, %171 : vector<16x128xf32>
      %cst_77 = arith.constant 5.000000e-01 : f32
      %204 = vector.broadcast %cst_77 : f32 to vector<16x128xf32>
      %205 = arith.mulf %204, %167 : vector<16x128xf32>
      %cst_78 = arith.constant 1.000000e+00 : f32
      %206 = vector.broadcast %cst_78 : f32 to vector<16x128xf32>
      %207 = arith.addf %206, %201 : vector<16x128xf32>
      %208 = arith.mulf %205, %207 : vector<16x128xf32>
      %209 = arith.addf %203, %208 : vector<16x128xf32>
      %210 = vector.broadcast %166 : f32 to vector<16x128xf32>
      %211 = arith.mulf %210, %209 : vector<16x128xf32>
      %212 = arith.addf %160, %211 : vector<16x128xf32>
      %213 = vector.shape_cast %22 : vector<16x1xi1> to vector<16x1xi1>
      %214 = vector.broadcast %213 : vector<16x1xi1> to vector<16x128xi1>
      %215 = arith.select %214, %212, %9 : vector<16x128xi1>, vector<16x128xf32>
      %c0_79 = arith.constant 0 : index
      %c0_80 = arith.constant 0 : index
      %216 = vector.load %arg12[%c0_79, %c0_80] : memref<16x128xf32, #tpu.memory_space<vmem>>, vector<16x128xf32>
      tpu.vector_store %arg12[%c0_79, %c0_80], %215 {strides = array<i32>} : memref<16x128xf32, #tpu.memory_space<vmem>>, vector<16x128xf32>,
    } else {
    }
    return
  }
  func.func @transform_0(%arg0: i32, %arg1: i32, %arg2: memref<1xi32, #tpu.memory_space<smem>>, %arg3: memref<3xf32, #tpu.memory_space<smem>>) -> (i32, i32) {
    %c0_i32 = arith.constant 0 : i32
    %c0_i32_0 = arith.constant 0 : i32
    return %arg0, %c0_i32 : i32, i32
  }
  func.func @transform_1(%arg0: i32, %arg1: i32, %arg2: memref<1xi32, #tpu.memory_space<smem>>, %arg3: memref<3xf32, #tpu.memory_space<smem>>) -> (i32, i32) {
    %c0_i32 = arith.constant 0 : i32
    %c0_i32_0 = arith.constant 0 : i32
    return %arg0, %c0_i32 : i32, i32
  }
  func.func @transform_2(%arg0: i32, %arg1: i32, %arg2: memref<1xi32, #tpu.memory_space<smem>>, %arg3: memref<3xf32, #tpu.memory_space<smem>>) -> (i32, i32) {
    %c0_i32 = arith.constant 0 : i32
    %c0_i32_0 = arith.constant 0 : i32
    return %arg0, %c0_i32 : i32, i32
  }
  func.func @transform_3(%arg0: i32, %arg1: i32, %arg2: memref<1xi32, #tpu.memory_space<smem>>, %arg3: memref<3xf32, #tpu.memory_space<smem>>) -> (i32, i32) {
    %c0_i32 = arith.constant 0 : i32
    %c0_i32_0 = arith.constant 0 : i32
    return %c0_i32, %arg1 : i32, i32
  }
  func.func @transform_4(%arg0: i32, %arg1: i32, %arg2: memref<1xi32, #tpu.memory_space<smem>>, %arg3: memref<3xf32, #tpu.memory_space<smem>>) -> (i32, i32) {
    %c0_i32 = arith.constant 0 : i32
    %c0_i32_0 = arith.constant 0 : i32
    return %c0_i32, %arg1 : i32, i32
  }
  func.func @transform_5(%arg0: i32, %arg1: i32, %arg2: memref<1xi32, #tpu.memory_space<smem>>, %arg3: memref<3xf32, #tpu.memory_space<smem>>) -> (i32, i32) {
    %c0_i32 = arith.constant 0 : i32
    %c0_i32_0 = arith.constant 0 : i32
    return %c0_i32, %arg1 : i32, i32
  }
  func.func @transform_6(%arg0: i32, %arg1: i32, %arg2: memref<1xi32, #tpu.memory_space<smem>>, %arg3: memref<3xf32, #tpu.memory_space<smem>>) -> (i32, i32) {
    %c0_i32 = arith.constant 0 : i32
    %c0_i32_0 = arith.constant 0 : i32
    %c0_i32_1 = arith.constant 0 : i32
    return %c0_i32, %c0_i32_0 : i32, i32
  }
  func.func @transform_7(%arg0: i32, %arg1: i32, %arg2: memref<1xi32, #tpu.memory_space<smem>>, %arg3: memref<3xf32, #tpu.memory_space<smem>>) -> (i32, i32) {
    %c0_i32 = arith.constant 0 : i32
    %c0_i32_0 = arith.constant 0 : i32
    %c0_i32_1 = arith.constant 0 : i32
    return %c0_i32, %c0_i32_0 : i32, i32
  }
  func.func @transform_8(%arg0: i32, %arg1: i32, %arg2: memref<1xi32, #tpu.memory_space<smem>>, %arg3: memref<3xf32, #tpu.memory_space<smem>>) -> (i32, i32) {
    %c0_i32 = arith.constant 0 : i32
    return %arg0, %arg1 : i32, i32
  }
}

</mosaic_0001>

<llo_original>
// kernel: tpu_custom_call.1
$region0: #{tpu_custom_call.1}
  #allocation0 [shape = 'u32[]', space=smem, size = 0x4, offset = 0x4, fixed_abs, tag = 'smem constant byte address 0x4 - core index']
  #allocation1 [shape = 'u32[144,128]{1,0:T(1,128)}', space=vmem, size = 0x12000, scoped, tag = 'internal scratch']
  #allocation2 [shape = 's32[1]{0}', space=sflag, size = 0x4, scoped, tag = 'scoped memory for tpu_custom_call.1']
  #allocation3 [shape = 's32[1]{0:T(128)S(6)}', space=smem, size = 0x200, scoped, tag = 'prefetched SMEM operand 0']
  #allocation4 [shape = 'u8[512]{0}', space=smem, size = 0x200, scoped, tag = 'prefetched SMEM operand 1']
  %s0 = inlined_call_operand.<no memory space> [shape: s32[1], index: 0, kind: input, shape index: {}]
  %s1 = inlined_call_operand.hbm [shape: f32[3], index: 1, kind: input, shape index: {}]
  %s2 = inlined_call_operand.vmem [shape: bf16[16,128], index: 2, kind: input, shape index: {}]
  %s3 = inlined_call_operand.vmem [shape: bf16[16,128], index: 3, kind: input, shape index: {}]
  %s4 = inlined_call_operand.vmem [shape: f32[16,1], index: 4, kind: input, shape index: {}]
  %s5 = inlined_call_operand.hbm [shape: bf16[128,128], index: 5, kind: input, shape index: {}]
  %s6 = inlined_call_operand.hbm [shape: bf16[128,128], index: 6, kind: input, shape index: {}]
  %s7 = inlined_call_operand.vmem [shape: f32[1,128], index: 7, kind: input, shape index: {}]
  %s8 = inlined_call_operand.vmem [shape: bf16[3,128], index: 8, kind: input, shape index: {}]
  %s9 = inlined_call_operand.vmem [shape: bf16[3,128], index: 9, kind: input, shape index: {}]
  %s10 = inlined_call_operand.hbm [shape: f32[16,128], index: 10, kind: output, shape index: {}]
  %s11 = sld [smem:[#allocation0]]
  $region58: #{tpu_custom_call.1} parent=0
    _
  %s13 = ssub.s32 1, %s11
  %s14 = scalar_select 0, %s13, %s11
  %15 = sst [smem:[#allocation3]] %s0
  %17 = dma.hbm_to_smem %s1, 16, [#allocation4], [#allocation2]
  %18 = dma.done [#allocation2], 16
  %19 = sfence
  $region1: #{tpu_custom_call.1} parent=0
    #allocation5 [shape = 'u8[32768]{0}', space=vmem, size = 0x8000, scoped, tag = 'input window, operand 5, single buffered']
    #allocation6 [shape = 's32[1]{0}', space=sflag, size = 0x4, scoped, tag = 'scoped memory for tpu_custom_call.1']
    #allocation7 [shape = 's32[1]{0}', space=sflag, size = 0x4, scoped, tag = 'scoped memory for tpu_custom_call.1']
    #allocation8 [shape = 'u8[32768]{0}', space=vmem, size = 0x8000, scoped, tag = 'input window, operand 6, single buffered']
    #allocation9 [shape = 's32[1]{0}', space=sflag, size = 0x4, scoped, tag = 'scoped memory for tpu_custom_call.1']
    #allocation10 [shape = 'u8[8192]{0}', space=vmem, size = 0x2000, scoped, tag = 'output window, operand 0, single buffered']
    %20 = vsyncpa [#allocation6], 0
    %21 = vsyncpa [#allocation9], 0
    %22 = vsyncpa [#allocation7], 0
    // Predicated region
    $region2: #{tpu_custom_call.1} parent=1 // pred_check
      _
    $region3: #{tpu_custom_call.1} parent=1 // pred_check_branch
      %24 = sbr.rel (0) target = $region5
    $region4: #{tpu_custom_call.1} parent=1 // pred_region
      _
    $region5: #{tpu_custom_call.1} parent=1 // pred_fallthru
      _
    // Predicated region
    $region6: #{tpu_custom_call.1} parent=1 // pred_check
      _
    $region7: #{tpu_custom_call.1} parent=1 // pred_check_branch
      %26 = sbr.rel (0) target = $region9
    $region8: #{tpu_custom_call.1} parent=1 // pred_region
      _
    $region9: #{tpu_custom_call.1} parent=1 // pred_fallthru
      _
    // Predicated region
    $region10: #{tpu_custom_call.1} parent=1 // pred_check
      _
    $region11: #{tpu_custom_call.1} parent=1 // pred_check_branch
      %28 = sbr.rel (0) target = $region13
    $region12: #{tpu_custom_call.1} parent=1 // pred_region
      _
    $region13: #{tpu_custom_call.1} parent=1 // pred_fallthru
      _
    // Predicated region
    $region14: #{tpu_custom_call.1} parent=1 // pred_check
      _
    $region15: #{tpu_custom_call.1} parent=1 // pred_check_branch
      %30 = sbr.rel (0) target = $region17
    $region16: #{tpu_custom_call.1} parent=1 // pred_region
      %s32 = ssub.s32 1024, 1024
      %33 = vsyncadd [#allocation6], %s32
      %s34 = sshll.u32 [#allocation5], 4
      %s35 = int_to_ptr.vmem [resolvable:$true] %s34
      %40 = dma.hbm_to_vmem [thread:$0]  %s5, 1024, %s35, [#allocation6], 64, 64, 4
    $region17: #{tpu_custom_call.1} parent=1 // pred_fallthru
      _
    // Predicated region
    $region18: #{tpu_custom_call.1} parent=1 // pred_check
      _
    $region19: #{tpu_custom_call.1} parent=1 // pred_check_branch
      %42 = sbr.rel (0) target = $region21
    $region20: #{tpu_custom_call.1} parent=1 // pred_region
      %s44 = ssub.s32 1024, 1024
      %45 = vsyncadd [#allocation9], %s44
      %s46 = sshll.u32 [#allocation8], 4
      %s47 = int_to_ptr.vmem [resolvable:$true] %s46
      %52 = dma.hbm_to_vmem [thread:$0]  %s6, 1024, %s47, [#allocation9], 64, 64, 4
    $region21: #{tpu_custom_call.1} parent=1 // pred_fallthru
      _
    // Predicated region
    $region22: #{tpu_custom_call.1} parent=1 // pred_check
      _
    $region23: #{tpu_custom_call.1} parent=1 // pred_check_branch
      %54 = sbr.rel (0) target = $region25
    $region24: #{tpu_custom_call.1} parent=1 // pred_region
      _
    $region25: #{tpu_custom_call.1} parent=1 // pred_fallthru
      _
    // Predicated region
    $region26: #{tpu_custom_call.1} parent=1 // pred_check
      _
    $region27: #{tpu_custom_call.1} parent=1 // pred_check_branch
      %56 = sbr.rel (0) target = $region29
    $region28: #{tpu_custom_call.1} parent=1 // pred_region
      _
    $region29: #{tpu_custom_call.1} parent=1 // pred_fallthru
      _
    // Predicated region
    $region30: #{tpu_custom_call.1} parent=1 // pred_check
      _
    $region31: #{tpu_custom_call.1} parent=1 // pred_check_branch
      %58 = sbr.rel (0) target = $region33
    $region32: #{tpu_custom_call.1} parent=1 // pred_region
      _
    $region33: #{tpu_custom_call.1} parent=1 // pred_fallthru
      _
    // Predicated region
    $region34: #{tpu_custom_call.1} parent=1 // pred_check
      _
    $region35: #{tpu_custom_call.1} parent=1 // pred_check_branch
      %60 = sbr.rel (0) target = $region37
    $region36: #{tpu_custom_call.1} parent=1 // pred_region
      %61 = dma.done [#allocation6], 1024
    $region37: #{tpu_custom_call.1} parent=1 // pred_fallthru
      _
    // Predicated region
    $region38: #{tpu_custom_call.1} parent=1 // pred_check
      _
    $region39: #{tpu_custom_call.1} parent=1 // pred_check_branch
      %63 = sbr.rel (0) target = $region41
    $region40: #{tpu_custom_call.1} parent=1 // pred_region
      %64 = dma.done [#allocation9], 1024
    $region41: #{tpu_custom_call.1} parent=1 // pred_fallthru
      _
    %s66 = sld [smem:[#allocation3]]
    %v67 = vld [vmem:[%s2] sm:$0xf]
    %v68 = vld [vmem:[%s2 + $0x4] sm:$0xf]
    %v69 = vld [vmem:[#allocation5] sm:$0xf]
    %v70 = vld [vmem:[#allocation5 + $0x4] sm:$0xf]
    %v71 = vld [vmem:[#allocation5 + $0x8] sm:$0xf]
    %v72 = vld [vmem:[#allocation5 + $0xc] sm:$0xf]
    %v73 = vld [vmem:[#allocation5 + $0x10] sm:$0xf]
    %v74 = vld [vmem:[#allocation5 + $0x14] sm:$0xf]
    %v75 = vld [vmem:[#allocation5 + $0x18] sm:$0xf]
    %v76 = vld [vmem:[#allocation5 + $0x1c] sm:$0xf]
    %v77 = vld [vmem:[#allocation5 + $0x20] sm:$0xf]
    %v78 = vld [vmem:[#allocation5 + $0x24] sm:$0xf]
    %v79 = vld [vmem:[#allocation5 + $0x28] sm:$0xf]
    %v80 = vld [vmem:[#allocation5 + $0x2c] sm:$0xf]
    %v81 = vld [vmem:[#allocation5 + $0x30] sm:$0xf]
    %v82 = vld [vmem:[#allocation5 + $0x34] sm:$0xf]
    %v83 = vld [vmem:[#allocation5 + $0x38] sm:$0xf]
    %v84 = vld [vmem:[#allocation5 + $0x3c] sm:$0xf]
    %v85 = vld [vmem:[%s7] sm:$0x1]
    %v87 = vlaneseq
    %v88 = vshrl.u32 %v87, 7
    %v89 = vsub.s32 0, %v88
    %v90 = vrot.slane %v85, %v89
    %v94 = vunpack.c.l.b16 %v67
    %v95 = vunpack.c.l.b16 %v68
    %v96 = vpack.c.b16 %v95, %v94
    %v114 = vunpack.c.l.b16 %v69
    %v115 = vunpack.c.l.b16 %v70
    %v116 = vunpack.c.l.b16 %v71
    %v117 = vunpack.c.l.b16 %v72
    %v118 = vunpack.c.l.b16 %v73
    %v119 = vunpack.c.l.b16 %v74
    %v120 = vunpack.c.l.b16 %v75
    %v121 = vunpack.c.l.b16 %v76
    %v122 = vunpack.c.l.b16 %v77
    %v123 = vunpack.c.l.b16 %v78
    %v124 = vunpack.c.l.b16 %v79
    %v125 = vunpack.c.l.b16 %v80
    %v126 = vunpack.c.l.b16 %v81
    %v127 = vunpack.c.l.b16 %v82
    %v128 = vunpack.c.l.b16 %v83
    %v129 = vunpack.c.l.b16 %v84
    %v130 = vpack.c.b16 %v115, %v114
    %v131 = vpack.c.b16 %v117, %v116
    %v132 = vpack.c.b16 %v119, %v118
    %v133 = vpack.c.b16 %v121, %v120
    %v134 = vpack.c.b16 %v123, %v122
    %v135 = vpack.c.b16 %v125, %v124
    %v136 = vpack.c.b16 %v127, %v126
    %v137 = vpack.c.b16 %v129, %v128
    %146 = vmatprep.subr.bf16.mxu0 0
    %147 = vmatpush1.bf16.msra.mxu0 %v130
    %148 = vmatprep.subr.bf16.mxu0 0
    %149 = vmatpush1.bf16.msra.mxu0 %v131
    %150 = vmatprep.subr.bf16.mxu0 0
    %151 = vmatpush1.bf16.msra.mxu0 %v132
    %152 = vmatprep.subr.bf16.mxu0 0
    %153 = vmatpush1.bf16.msra.mxu0 %v133
    %154 = vmatprep.subr.bf16.mxu0 0
    %155 = vmatpush1.bf16.msra.mxu0 %v134
    %156 = vmatprep.subr.bf16.mxu0 0
    %157 = vmatpush1.bf16.msra.mxu0 %v135
    %158 = vmatprep.subr.bf16.mxu0 0
    %159 = vmatpush1.bf16.msra.mxu0 %v136
    %160 = vmatprep.subr.bf16.mxu0 0
    %161 = vmatpush1.bf16.msra.mxu0 %v137
    %162 = vmatprep.subr.bf16.mxu0 0
    %163 = vmatpush1.bf16.msra.mxu0 0
    %164 = vmatprep.subr.bf16.mxu0 0
    %165 = vmatpush1.bf16.msra.mxu0 0
    %166 = vmatprep.subr.bf16.mxu0 0
    %167 = vmatpush1.bf16.msra.mxu0 0
    %168 = vmatprep.subr.bf16.mxu0 0
    %169 = vmatpush1.bf16.msra.mxu0 0
    %170 = vmatprep.subr.bf16.mxu0 0
    %171 = vmatpush1.bf16.msra.mxu0 0
    %172 = vmatprep.subr.bf16.mxu0 0
    %173 = vmatpush1.bf16.msra.mxu0 0
    %174 = vmatprep.subr.bf16.mxu0 0
    %175 = vmatpush1.bf16.msra.mxu0 0
    %176 = vmatprep.subr.bf16.mxu0 0
    %177 = vmatpush1.bf16.msra.mxu0 0
    %178 = vmatprep.mubr.bf16.mxu0 0
    %179 = vmatmul.mubr.bf16.gmra.mrb[0].mxu0 %v96
    %v180 = vpop.f32.mrb[0].mxu0
    %v181 = vadd.f32 %v90, %v180
    %v182 = vpop.f32.mrb[0].mxu0
    %v183 = vpop.f32.mrb[0].mxu0
    %v184 = vadd.f32 %v90, %v183
    %v185 = vpop.f32.mrb[0].mxu0
    %186 = vdwg.mxu0
    %v187 = vmax.f32 %v181, 0.0
    %v188 = vmax.f32 %v184, 0.0
    %p189 = scmp.eq.s32.totalorder %s66, 0
    // Predicated region
    $region42: #{tpu_custom_call.1} parent=1 // pred_check
      %p190 = pneg %p189
    $region43: #{tpu_custom_call.1} parent=1 // pred_check_branch
      %192 = sbr.rel (%p190) target = $region45
    $region44: #{tpu_custom_call.1} parent=1 // pred_region
      %193 = vst [vmem:[#allocation10] sm:$0xff] %v187
      %194 = vst [vmem:[#allocation10 + $0x8] sm:$0xff] %v188
    $region45: #{tpu_custom_call.1} parent=1 // pred_fallthru
      _
    %p195 = scmp.ne.s32.totalorder %s66, 0
    // Predicated region
    $region46: #{tpu_custom_call.1} parent=1 // pred_check
      %p196 = pneg %p195
    $region47: #{tpu_custom_call.1} parent=1 // pred_check_branch
      %198 = sbr.rel (%p196) target = $region49
    $region48: #{tpu_custom_call.1} parent=1 // pred_region
      %v199 = vld [vmem:[%s3] sm:$0xf]
      %v200 = vld [vmem:[%s3 + $0x4] sm:$0xf]
      %v201 = vld [vmem:[#allocation8] sm:$0xf]
      %v202 = vld [vmem:[#allocation8 + $0x4] sm:$0xf]
      %v203 = vld [vmem:[#allocation8 + $0x8] sm:$0xf]
      %v204 = vld [vmem:[#allocation8 + $0xc] sm:$0xf]
      %v205 = vld [vmem:[#allocation8 + $0x10] sm:$0xf]
      %v206 = vld [vmem:[#allocation8 + $0x14] sm:$0xf]
      %v207 = vld [vmem:[#allocation8 + $0x18] sm:$0xf]
      %v208 = vld [vmem:[#allocation8 + $0x1c] sm:$0xf]
      %v209 = vld [vmem:[#allocation8 + $0x20] sm:$0xf]
      %v210 = vld [vmem:[#allocation8 + $0x24] sm:$0xf]
      %v211 = vld [vmem:[#allocation8 + $0x28] sm:$0xf]
      %v212 = vld [vmem:[#allocation8 + $0x2c] sm:$0xf]
      %v213 = vld [vmem:[#allocation8 + $0x30] sm:$0xf]
      %v214 = vld [vmem:[#allocation8 + $0x34] sm:$0xf]
      %v215 = vld [vmem:[#allocation8 + $0x38] sm:$0xf]
      %v216 = vld [vmem:[#allocation8 + $0x3c] sm:$0xf]
      %v217 = vld [vmem:[%s8] sm:$0x3]
      %v218 = vld [vmem:[%s9] sm:$0x3]
      %v219 = vld [vmem:[%s4] sm:$0xff]
      %v220 = vld [vmem:[%s4 + $0x8] sm:$0xff]
      %vm221 = vcmp.gt.f32.partialorder %v219, 0.0
      %vm222 = vcmp.gt.f32.partialorder %v220, 0.0
      %v224 = vpack.i.b16 %v217, %v217
      %v226 = vlaneseq
      %v227 = vshrl.u32 %v226, 7
      %v228 = vsub.s32 0, %v227
      %v229 = vrot.slane %v224, %v228
      %v231 = vunpack.c.l.b16 %v229
      %v232 = vpack.c.b16 %v231, %v231
      %v234 = vmul.bf16 %v199, %v232
      %v235 = vmul.bf16 %v200, %v232
      %v236 = vadd.bf16 %v67, %v234
      %v237 = vadd.bf16 %v68, %v235
      %v240 = vunpack.c.l.b16 %v236
      %v241 = vunpack.c.l.b16 %v237
      %v242 = vpack.c.b16 %v241, %v240
      %244 = vmatprep.subr.bf16.mxu0 0
      %245 = vmatpush1.bf16.msra.mxu0 %v130
      %246 = vmatprep.subr.bf16.mxu0 0
      %247 = vmatpush1.bf16.msra.mxu0 %v131
      %248 = vmatprep.subr.bf16.mxu0 0
      %249 = vmatpush1.bf16.msra.mxu0 %v132
      %250 = vmatprep.subr.bf16.mxu0 0
      %251 = vmatpush1.bf16.msra.mxu0 %v133
      %252 = vmatprep.subr.bf16.mxu0 0
      %253 = vmatpush1.bf16.msra.mxu0 %v134
      %254 = vmatprep.subr.bf16.mxu0 0
      %255 = vmatpush1.bf16.msra.mxu0 %v135
      %256 = vmatprep.subr.bf16.mxu0 0
      %257 = vmatpush1.bf16.msra.mxu0 %v136
      %258 = vmatprep.subr.bf16.mxu0 0
      %259 = vmatpush1.bf16.msra.mxu0 %v137
      %260 = vmatprep.subr.bf16.mxu0 0
      %261 = vmatpush1.bf16.msra.mxu0 0
      %262 = vmatprep.subr.bf16.mxu0 0
      %263 = vmatpush1.bf16.msra.mxu0 0
      %264 = vmatprep.subr.bf16.mxu0 0
      %265 = vmatpush1.bf16.msra.mxu0 0
      %266 = vmatprep.subr.bf16.mxu0 0
      %267 = vmatpush1.bf16.msra.mxu0 0
      %268 = vmatprep.subr.bf16.mxu0 0
      %269 = vmatpush1.bf16.msra.mxu0 0
      %270 = vmatprep.subr.bf16.mxu0 0
      %271 = vmatpush1.bf16.msra.mxu0 0
      %272 = vmatprep.subr.bf16.mxu0 0
      %273 = vmatpush1.bf16.msra.mxu0 0
      %274 = vmatprep.subr.bf16.mxu0 0
      %275 = vmatpush1.bf16.msra.mxu0 0
      %276 = vmatprep.mubr.bf16.mxu0 0
      %277 = vmatmul.mubr.bf16.gmra.mrb[0].mxu0 %v242
      %v278 = vpop.f32.mrb[0].mxu0
      %v279 = vadd.f32 %v90, %v278
      %v280 = vpop.f32.mrb[0].mxu0
      %v281 = vpop.f32.mrb[0].mxu0
      %v282 = vadd.f32 %v90, %v281
      %v283 = vpop.f32.mrb[0].mxu0
      %284 = vdwg.mxu0
      %v285 = vshrl.u32 %v217, 16
      %v286 = vpack.i.b16 %v285, %v285
      %v288 = vlaneseq
      %v289 = vshrl.u32 %v288, 7
      %v290 = vsub.s32 0, %v289
      %v291 = vrot.slane %v286, %v290
      %v293 = vunpack.c.l.b16 %v291
      %v294 = vpack.c.b16 %v293, %v293
      %v296 = vmul.bf16 %v199, %v294
      %v297 = vmul.bf16 %v200, %v294
      %v298 = vadd.bf16 %v67, %v296
      %v299 = vadd.bf16 %v68, %v297
      %v302 = vunpack.c.l.b16 %v298
      %v303 = vunpack.c.l.b16 %v299
      %v304 = vpack.c.b16 %v303, %v302
      %306 = vmatprep.subr.bf16.mxu0 0
      %307 = vmatpush1.bf16.msra.mxu0 %v130
      %308 = vmatprep.subr.bf16.mxu0 0
      %309 = vmatpush1.bf16.msra.mxu0 %v131
      %310 = vmatprep.subr.bf16.mxu0 0
      %311 = vmatpush1.bf16.msra.mxu0 %v132
      %312 = vmatprep.subr.bf16.mxu0 0
      %313 = vmatpush1.bf16.msra.mxu0 %v133
      %314 = vmatprep.subr.bf16.mxu0 0
      %315 = vmatpush1.bf16.msra.mxu0 %v134
      %316 = vmatprep.subr.bf16.mxu0 0
      %317 = vmatpush1.bf16.msra.mxu0 %v135
      %318 = vmatprep.subr.bf16.mxu0 0
      %319 = vmatpush1.bf16.msra.mxu0 %v136
      %320 = vmatprep.subr.bf16.mxu0 0
      %321 = vmatpush1.bf16.msra.mxu0 %v137
      %322 = vmatprep.subr.bf16.mxu0 0
      %323 = vmatpush1.bf16.msra.mxu0 0
      %324 = vmatprep.subr.bf16.mxu0 0
      %325 = vmatpush1.bf16.msra.mxu0 0
      %326 = vmatprep.subr.bf16.mxu0 0
      %327 = vmatpush1.bf16.msra.mxu0 0
      %328 = vmatprep.subr.bf16.mxu0 0
      %329 = vmatpush1.bf16.msra.mxu0 0
      %330 = vmatprep.subr.bf16.mxu0 0
      %331 = vmatpush1.bf16.msra.mxu0 0
      %332 = vmatprep.subr.bf16.mxu0 0
      %333 = vmatpush1.bf16.msra.mxu0 0
      %334 = vmatprep.subr.bf16.mxu0 0
      %335 = vmatpush1.bf16.msra.mxu0 0
      %336 = vmatprep.subr.bf16.mxu0 0
      %337 = vmatpush1.bf16.msra.mxu0 0
      %338 = vmatprep.mubr.bf16.mxu0 0
      %339 = vmatmul.mubr.bf16.gmra.mrb[0].mxu0 %v304
      %v340 = vpop.f32.mrb[0].mxu0
      %v341 = vadd.f32 %v90, %v340
      %v342 = vpop.f32.mrb[0].mxu0
      %v343 = vpop.f32.mrb[0].mxu0
      %v344 = vadd.f32 %v90, %v343
      %v345 = vpop.f32.mrb[0].mxu0
      %346 = vdwg.mxu0
      %v347 = vlaneseq
      %v348 = vshrl.u32 %v347, 7
      %v349 = vsub.s32 1, %v348
      %v350 = vrot.slane %v224, %v349
      %v352 = vunpack.c.l.b16 %v350
      %v353 = vpack.c.b16 %v352, %v352
      %v355 = vmul.bf16 %v199, %v353
      %v356 = vmul.bf16 %v200, %v353
      %v357 = vadd.bf16 %v67, %v355
      %v358 = vadd.bf16 %v68, %v356
      %v361 = vunpack.c.l.b16 %v357
      %v362 = vunpack.c.l.b16 %v358
      %v363 = vpack.c.b16 %v362, %v361
      %365 = vmatprep.subr.bf16.mxu0 0
      %366 = vmatpush1.bf16.msra.mxu0 %v130
      %367 = vmatprep.subr.bf16.mxu0 0
      %368 = vmatpush1.bf16.msra.mxu0 %v131
      %369 = vmatprep.subr.bf16.mxu0 0
      %370 = vmatpush1.bf16.msra.mxu0 %v132
      %371 = vmatprep.subr.bf16.mxu0 0
      %372 = vmatpush1.bf16.msra.mxu0 %v133
      %373 = vmatprep.subr.bf16.mxu0 0
      %374 = vmatpush1.bf16.msra.mxu0 %v134
      %375 = vmatprep.subr.bf16.mxu0 0
      %376 = vmatpush1.bf16.msra.mxu0 %v135
      %377 = vmatprep.subr.bf16.mxu0 0
      %378 = vmatpush1.bf16.msra.mxu0 %v136
      %379 = vmatprep.subr.bf16.mxu0 0
      %380 = vmatpush1.bf16.msra.mxu0 %v137
      %381 = vmatprep.subr.bf16.mxu0 0
      %382 = vmatpush1.bf16.msra.mxu0 0
      %383 = vmatprep.subr.bf16.mxu0 0
      %384 = vmatpush1.bf16.msra.mxu0 0
      %385 = vmatprep.subr.bf16.mxu0 0
      %386 = vmatpush1.bf16.msra.mxu0 0
      %387 = vmatprep.subr.bf16.mxu0 0
      %388 = vmatpush1.bf16.msra.mxu0 0
      %389 = vmatprep.subr.bf16.mxu0 0
      %390 = vmatpush1.bf16.msra.mxu0 0
      %391 = vmatprep.subr.bf16.mxu0 0
      %392 = vmatpush1.bf16.msra.mxu0 0
      %393 = vmatprep.subr.bf16.mxu0 0
      %394 = vmatpush1.bf16.msra.mxu0 0
      %395 = vmatprep.subr.bf16.mxu0 0
      %396 = vmatpush1.bf16.msra.mxu0 0
      %397 = vmatprep.mubr.bf16.mxu0 0
      %398 = vmatmul.mubr.bf16.gmra.mrb[0].mxu0 %v363
      %v399 = vpop.f32.mrb[0].mxu0
      %v400 = vadd.f32 %v90, %v399
      %v401 = vpop.f32.mrb[0].mxu0
      %v402 = vpop.f32.mrb[0].mxu0
      %v403 = vadd.f32 %v90, %v402
      %v404 = vpop.f32.mrb[0].mxu0
      %405 = vdwg.mxu0
      %v407 = vpack.i.b16 %v218, %v218
      %v409 = vlaneseq
      %v410 = vshrl.u32 %v409, 7
      %v411 = vsub.s32 0, %v410
      %v412 = vrot.slane %v407, %v411
      %v414 = vunpack.c.l.b16 %v412
      %v415 = vpack.c.b16 %v414, %v414
      %v417 = vmul.bf16 %v199, %v415
      %v418 = vmul.bf16 %v200, %v415
      %v421 = vunpack.c.l.b16 %v417
      %v422 = vunpack.c.l.b16 %v418
      %v423 = vpack.c.b16 %v422, %v421
      %v441 = vunpack.c.l.b16 %v201
      %v442 = vunpack.c.l.b16 %v202
      %v443 = vunpack.c.l.b16 %v203
      %v444 = vunpack.c.l.b16 %v204
      %v445 = vunpack.c.l.b16 %v205
      %v446 = vunpack.c.l.b16 %v206
      %v447 = vunpack.c.l.b16 %v207
      %v448 = vunpack.c.l.b16 %v208
      %v449 = vunpack.c.l.b16 %v209
      %v450 = vunpack.c.l.b16 %v210
      %v451 = vunpack.c.l.b16 %v211
      %v452 = vunpack.c.l.b16 %v212
      %v453 = vunpack.c.l.b16 %v213
      %v454 = vunpack.c.l.b16 %v214
      %v455 = vunpack.c.l.b16 %v215
      %v456 = vunpack.c.l.b16 %v216
      %v457 = vpack.c.b16 %v442, %v441
      %v458 = vpack.c.b16 %v444, %v443
      %v459 = vpack.c.b16 %v446, %v445
      %v460 = vpack.c.b16 %v448, %v447
      %v461 = vpack.c.b16 %v450, %v449
      %v462 = vpack.c.b16 %v452, %v451
      %v463 = vpack.c.b16 %v454, %v453
      %v464 = vpack.c.b16 %v456, %v455
      %473 = vmatprep.subr.bf16.mxu0 0
      %474 = vmatpush1.bf16.msra.mxu0 %v457
      %475 = vmatprep.subr.bf16.mxu0 0
      %476 = vmatpush1.bf16.msra.mxu0 %v458
      %477 = vmatprep.subr.bf16.mxu0 0
      %478 = vmatpush1.bf16.msra.mxu0 %v459
      %479 = vmatprep.subr.bf16.mxu0 0
      %480 = vmatpush1.bf16.msra.mxu0 %v460
      %481 = vmatprep.subr.bf16.mxu0 0
      %482 = vmatpush1.bf16.msra.mxu0 %v461
      %483 = vmatprep.subr.bf16.mxu0 0
      %484 = vmatpush1.bf16.msra.mxu0 %v462
      %485 = vmatprep.subr.bf16.mxu0 0
      %486 = vmatpush1.bf16.msra.mxu0 %v463
      %487 = vmatprep.subr.bf16.mxu0 0
      %488 = vmatpush1.bf16.msra.mxu0 %v464
      %489 = vmatprep.subr.bf16.mxu0 0
      %490 = vmatpush1.bf16.msra.mxu0 0
      %491 = vmatprep.subr.bf16.mxu0 0
      %492 = vmatpush1.bf16.msra.mxu0 0
      %493 = vmatprep.subr.bf16.mxu0 0
      %494 = vmatpush1.bf16.msra.mxu0 0
      %495 = vmatprep.subr.bf16.mxu0 0
      %496 = vmatpush1.bf16.msra.mxu0 0
      %497 = vmatprep.subr.bf16.mxu0 0
      %498 = vmatpush1.bf16.msra.mxu0 0
      %499 = vmatprep.subr.bf16.mxu0 0
      %500 = vmatpush1.bf16.msra.mxu0 0
      %501 = vmatprep.subr.bf16.mxu0 0
      %502 = vmatpush1.bf16.msra.mxu0 0
      %503 = vmatprep.subr.bf16.mxu0 0
      %504 = vmatpush1.bf16.msra.mxu0 0
      %505 = vmatprep.mubr.bf16.mxu0 0
      %506 = vmatmul.mubr.bf16.gmra.mrb[0].mxu0 %v423
      %v507 = vpop.f32.mrb[0].mxu0
      %v508 = vadd.f32 0.0, %v507
      %v509 = vpop.f32.mrb[0].mxu0
      %v510 = vpop.f32.mrb[0].mxu0
      %v511 = vadd.f32 0.0, %v510
      %v512 = vpop.f32.mrb[0].mxu0
      %513 = vdwg.mxu0
      %v514 = vshrl.u32 %v218, 16
      %v515 = vpack.i.b16 %v514, %v514
      %v517 = vlaneseq
      %v518 = vshrl.u32 %v517, 7
      %v519 = vsub.s32 0, %v518
      %v520 = vrot.slane %v515, %v519
      %v522 = vunpack.c.l.b16 %v520
      %v523 = vpack.c.b16 %v522, %v522
      %v525 = vmul.bf16 %v199, %v523
      %v526 = vmul.bf16 %v200, %v523
      %v529 = vunpack.c.l.b16 %v525
      %v530 = vunpack.c.l.b16 %v526
      %v531 = vpack.c.b16 %v530, %v529
      %533 = vmatprep.subr.bf16.mxu0 0
      %534 = vmatpush1.bf16.msra.mxu0 %v457
      %535 = vmatprep.subr.bf16.mxu0 0
      %536 = vmatpush1.bf16.msra.mxu0 %v458
      %537 = vmatprep.subr.bf16.mxu0 0
      %538 = vmatpush1.bf16.msra.mxu0 %v459
      %539 = vmatprep.subr.bf16.mxu0 0
      %540 = vmatpush1.bf16.msra.mxu0 %v460
      %541 = vmatprep.subr.bf16.mxu0 0
      %542 = vmatpush1.bf16.msra.mxu0 %v461
      %543 = vmatprep.subr.bf16.mxu0 0
      %544 = vmatpush1.bf16.msra.mxu0 %v462
      %545 = vmatprep.subr.bf16.mxu0 0
      %546 = vmatpush1.bf16.msra.mxu0 %v463
      %547 = vmatprep.subr.bf16.mxu0 0
      %548 = vmatpush1.bf16.msra.mxu0 %v464
      %549 = vmatprep.subr.bf16.mxu0 0
      %550 = vmatpush1.bf16.msra.mxu0 0
      %551 = vmatprep.subr.bf16.mxu0 0
      %552 = vmatpush1.bf16.msra.mxu0 0
      %553 = vmatprep.subr.bf16.mxu0 0
      %554 = vmatpush1.bf16.msra.mxu0 0
      %555 = vmatprep.subr.bf16.mxu0 0
      %556 = vmatpush1.bf16.msra.mxu0 0
      %557 = vmatprep.subr.bf16.mxu0 0
      %558 = vmatpush1.bf16.msra.mxu0 0
      %559 = vmatprep.subr.bf16.mxu0 0
      %560 = vmatpush1.bf16.msra.mxu0 0
      %561 = vmatprep.subr.bf16.mxu0 0
      %562 = vmatpush1.bf16.msra.mxu0 0
      %563 = vmatprep.subr.bf16.mxu0 0
      %564 = vmatpush1.bf16.msra.mxu0 0
      %565 = vmatprep.mubr.bf16.mxu0 0
      %566 = vmatmul.mubr.bf16.gmra.mrb[0].mxu0 %v531
      %v567 = vpop.f32.mrb[0].mxu0
      %v568 = vadd.f32 0.0, %v567
      %v569 = vpop.f32.mrb[0].mxu0
      %v570 = vpop.f32.mrb[0].mxu0
      %v571 = vadd.f32 0.0, %v570
      %v572 = vpop.f32.mrb[0].mxu0
      %573 = vdwg.mxu0
      %v574 = vlaneseq
      %v575 = vshrl.u32 %v574, 7
      %v576 = vsub.s32 1, %v575
      %v577 = vrot.slane %v407, %v576
      %v579 = vunpack.c.l.b16 %v577
      %v580 = vpack.c.b16 %v579, %v579
      %v582 = vmul.bf16 %v199, %v580
      %v583 = vmul.bf16 %v200, %v580
      %v586 = vunpack.c.l.b16 %v582
      %v587 = vunpack.c.l.b16 %v583
      %v588 = vpack.c.b16 %v587, %v586
      %590 = vmatprep.subr.bf16.mxu0 0
      %591 = vmatpush1.bf16.msra.mxu0 %v457
      %592 = vmatprep.subr.bf16.mxu0 0
      %593 = vmatpush1.bf16.msra.mxu0 %v458
      %594 = vmatprep.subr.bf16.mxu0 0
      %595 = vmatpush1.bf16.msra.mxu0 %v459
      %596 = vmatprep.subr.bf16.mxu0 0
      %597 = vmatpush1.bf16.msra.mxu0 %v460
      %598 = vmatprep.subr.bf16.mxu0 0
      %599 = vmatpush1.bf16.msra.mxu0 %v461
      %600 = vmatprep.subr.bf16.mxu0 0
      %601 = vmatpush1.bf16.msra.mxu0 %v462
      %602 = vmatprep.subr.bf16.mxu0 0
      %603 = vmatpush1.bf16.msra.mxu0 %v463
      %604 = vmatprep.subr.bf16.mxu0 0
      %605 = vmatpush1.bf16.msra.mxu0 %v464
      %606 = vmatprep.subr.bf16.mxu0 0
      %607 = vmatpush1.bf16.msra.mxu0 0
      %608 = vmatprep.subr.bf16.mxu0 0
      %609 = vmatpush1.bf16.msra.mxu0 0
      %610 = vmatprep.subr.bf16.mxu0 0
      %611 = vmatpush1.bf16.msra.mxu0 0
      %612 = vmatprep.subr.bf16.mxu0 0
      %613 = vmatpush1.bf16.msra.mxu0 0
      %614 = vmatprep.subr.bf16.mxu0 0
      %615 = vmatpush1.bf16.msra.mxu0 0
      %616 = vmatprep.subr.bf16.mxu0 0
      %617 = vmatpush1.bf16.msra.mxu0 0
      %618 = vmatprep.subr.bf16.mxu0 0
      %619 = vmatpush1.bf16.msra.mxu0 0
      %620 = vmatprep.subr.bf16.mxu0 0
      %621 = vmatpush1.bf16.msra.mxu0 0
      %622 = vmatprep.mubr.bf16.mxu0 0
      %623 = vmatmul.mubr.bf16.gmra.mrb[0].mxu0 %v588
      %v624 = vpop.f32.mrb[0].mxu0
      %v625 = vadd.f32 0.0, %v624
      %v626 = vpop.f32.mrb[0].mxu0
      %v627 = vpop.f32.mrb[0].mxu0
      %v628 = vadd.f32 0.0, %v627
      %v629 = vpop.f32.mrb[0].mxu0
      %630 = vdwg.mxu0
      %vm631 = vcmp.gt.f32.partialorder %v508, 0.0
      %vm632 = vcmp.gt.f32.partialorder %v511, 0.0
      %v633 = vsel %vm631, %v508, 1.0
      %v634 = vsel %vm632, %v511, 1.0
      %v635 = vrsqrt.pop %v633
      %v636 = vrsqrt.pop %v634
      %s637 = sld [smem:[#allocation4]]
      %v638 = vmul.f32 %v279, %v635
      %v639 = vmul.f32 %v282, %v636
      %v640 = vmul.f32 %v638, %v638
      %v641 = vmul.f32 %v639, %v639
      %v642 = vmul.f32 %v640, -0.5
      %v643 = vmul.f32 %v641, -0.5
      %v644 = vmul.f32 %v642, 1.442695
      %v645 = vpow.pop %v644
      %v646 = vmul.f32 %v643, 1.442695
      %v647 = vpow.pop %v646
      %v648 = vand.u32 2147483647, %v638
      %v649 = vand.u32 2147483647, %v639
      %v650 = vmul.f32 %v648, 0.70710677
      %v651 = vmul.f32 %v649, 0.70710677
      %v652 = vmul.f32 %v650, 0.3275911
      %v653 = vmul.f32 %v651, 0.3275911
      %v654 = vadd.f32 %v652, 1.0
      %v655 = vadd.f32 %v653, 1.0
      %v656 = vrcp.pop %v654
      %v657 = vrcp.pop %v655
      %v658 = vmul.f32 %v656, 1.0614054
      %v659 = vmul.f32 %v657, 1.0614054
      %v660 = vadd.f32 %v658, -1.4531521
      %v661 = vadd.f32 %v659, -1.4531521
      %v662 = vmul.f32 %v660, %v656
      %v663 = vmul.f32 %v661, %v657
      %v664 = vadd.f32 %v662, 1.4214138
      %v665 = vadd.f32 %v663, 1.4214138
      %v666 = vmul.f32 %v664, %v656
      %v667 = vmul.f32 %v665, %v657
      %v668 = vadd.f32 %v666, -0.28449672
      %v669 = vadd.f32 %v667, -0.28449672
      %v670 = vmul.f32 %v668, %v656
      %v671 = vmul.f32 %v669, %v657
      %v672 = vadd.f32 %v670, 0.2548296
      %v673 = vadd.f32 %v671, 0.2548296
      %v674 = vmul.f32 %v672, %v656
      %v675 = vmul.f32 %v673, %v657
      %v676 = vmul.f32 %v674, %v645
      %v677 = vmul.f32 %v675, %v647
      %v678 = vsub.f32 1.0, %v676
      %v679 = vsub.f32 1.0, %v677
      %vm680 = vcmp.ge.f32.partialorder %v638, 0.0
      %vm681 = vcmp.ge.f32.partialorder %v639, 0.0
      %v682 = vsub.f32 0.0, %v678
      %v683 = vsub.f32 0.0, %v679
      %v684 = vsel %vm680, %v678, %v682
      %v685 = vsel %vm681, %v679, %v683
      %v686 = vmul.f32 %v645, 0.3989423
      %v687 = vmul.f32 %v647, 0.3989423
      %v688 = vmul.f32 %v638, 0.5
      %v689 = vmul.f32 %v639, 0.5
      %v690 = vadd.f32 %v684, 1.0
      %v691 = vadd.f32 %v685, 1.0
      %v692 = vmul.f32 %v688, %v690
      %v693 = vmul.f32 %v689, %v691
      %v694 = vadd.f32 %v686, %v692
      %v695 = vadd.f32 %v687, %v693
      %v696 = vstv %s637
      %v697 = vmul.f32 %v696, %v694
      %v698 = vmul.f32 %v696, %v695
      %v699 = vadd.f32 %v697, 0.0
      %v700 = vadd.f32 %v698, 0.0
      %vm701 = vcmp.gt.f32.partialorder %v568, 0.0
      %vm702 = vcmp.gt.f32.partialorder %v571, 0.0
      %v703 = vsel %vm701, %v568, 1.0
      %v704 = vsel %vm702, %v571, 1.0
      %v705 = vrsqrt.pop %v703
      %v706 = vrsqrt.pop %v704
      %s707 = sld [smem:[#allocation4 + $0x1]]
      %v708 = vmul.f32 %v341, %v705
      %v709 = vmul.f32 %v344, %v706
      %v710 = vmul.f32 %v708, %v708
      %v711 = vmul.f32 %v709, %v709
      %v712 = vmul.f32 %v710, -0.5
      %v713 = vmul.f32 %v711, -0.5
      %v714 = vmul.f32 %v712, 1.442695
      %v715 = vpow.pop %v714
      %v716 = vmul.f32 %v713, 1.442695
      %v717 = vpow.pop %v716
      %v718 = vand.u32 2147483647, %v708
      %v719 = vand.u32 2147483647, %v709
      %v720 = vmul.f32 %v718, 0.70710677
      %v721 = vmul.f32 %v719, 0.70710677
      %v722 = vmul.f32 %v720, 0.3275911
      %v723 = vmul.f32 %v721, 0.3275911
      %v724 = vadd.f32 %v722, 1.0
      %v725 = vadd.f32 %v723, 1.0
      %v726 = vrcp.pop %v724
      %v727 = vrcp.pop %v725
      %v728 = vmul.f32 %v726, 1.0614054
      %v729 = vmul.f32 %v727, 1.0614054
      %v730 = vadd.f32 %v728, -1.4531521
      %v731 = vadd.f32 %v729, -1.4531521
      %v732 = vmul.f32 %v730, %v726
      %v733 = vmul.f32 %v731, %v727
      %v734 = vadd.f32 %v732, 1.4214138
      %v735 = vadd.f32 %v733, 1.4214138
      %v736 = vmul.f32 %v734, %v726
      %v737 = vmul.f32 %v735, %v727
      %v738 = vadd.f32 %v736, -0.28449672
      %v739 = vadd.f32 %v737, -0.28449672
      %v740 = vmul.f32 %v738, %v726
      %v741 = vmul.f32 %v739, %v727
      %v742 = vadd.f32 %v740, 0.2548296
      %v743 = vadd.f32 %v741, 0.2548296
      %v744 = vmul.f32 %v742, %v726
      %v745 = vmul.f32 %v743, %v727
      %v746 = vmul.f32 %v744, %v715
      %v747 = vmul.f32 %v745, %v717
      %v748 = vsub.f32 1.0, %v746
      %v749 = vsub.f32 1.0, %v747
      %vm750 = vcmp.ge.f32.partialorder %v708, 0.0
      %vm751 = vcmp.ge.f32.partialorder %v709, 0.0
      %v752 = vsub.f32 0.0, %v748
      %v753 = vsub.f32 0.0, %v749
      %v754 = vsel %vm750, %v748, %v752
      %v755 = vsel %vm751, %v749, %v753
      %v756 = vmul.f32 %v715, 0.3989423
      %v757 = vmul.f32 %v717, 0.3989423
      %v758 = vmul.f32 %v708, 0.5
      %v759 = vmul.f32 %v709, 0.5
      %v760 = vadd.f32 %v754, 1.0
      %v761 = vadd.f32 %v755, 1.0
      %v762 = vmul.f32 %v758, %v760
      %v763 = vmul.f32 %v759, %v761
      %v764 = vadd.f32 %v756, %v762
      %v765 = vadd.f32 %v757, %v763
      %v766 = vstv %s707
      %v767 = vmul.f32 %v766, %v764
      %v768 = vmul.f32 %v766, %v765
      %v769 = vadd.f32 %v699, %v767
      %v770 = vadd.f32 %v700, %v768
      %vm771 = vcmp.gt.f32.partialorder %v625, 0.0
      %vm772 = vcmp.gt.f32.partialorder %v628, 0.0
      %v773 = vsel %vm771, %v625, 1.0
      %v774 = vsel %vm772, %v628, 1.0
      %v775 = vrsqrt.pop %v773
      %v776 = vrsqrt.pop %v774
      %s777 = sld [smem:[#allocation4 + $0x2]]
      %v778 = vmul.f32 %v400, %v775
      %v779 = vmul.f32 %v403, %v776
      %v780 = vmul.f32 %v778, %v778
      %v781 = vmul.f32 %v779, %v779
      %v782 = vmul.f32 %v780, -0.5
      %v783 = vmul.f32 %v781, -0.5
      %v784 = vmul.f32 %v782, 1.442695
      %v785 = vpow.pop %v784
      %v786 = vmul.f32 %v783, 1.442695
      %v787 = vpow.pop %v786
      %v788 = vand.u32 2147483647, %v778
      %v789 = vand.u32 2147483647, %v779
      %v790 = vmul.f32 %v788, 0.70710677
      %v791 = vmul.f32 %v789, 0.70710677
      %v792 = vmul.f32 %v790, 0.3275911
      %v793 = vmul.f32 %v791, 0.3275911
      %v794 = vadd.f32 %v792, 1.0
      %v795 = vadd.f32 %v793, 1.0
      %v796 = vrcp.pop %v794
      %v797 = vrcp.pop %v795
      %v798 = vmul.f32 %v796, 1.0614054
      %v799 = vmul.f32 %v797, 1.0614054
      %v800 = vadd.f32 %v798, -1.4531521
      %v801 = vadd.f32 %v799, -1.4531521
      %v802 = vmul.f32 %v800, %v796
      %v803 = vmul.f32 %v801, %v797
      %v804 = vadd.f32 %v802, 1.4214138
      %v805 = vadd.f32 %v803, 1.4214138
      %v806 = vmul.f32 %v804, %v796
      %v807 = vmul.f32 %v805, %v797
      %v808 = vadd.f32 %v806, -0.28449672
      %v809 = vadd.f32 %v807, -0.28449672
      %v810 = vmul.f32 %v808, %v796
      %v811 = vmul.f32 %v809, %v797
      %v812 = vadd.f32 %v810, 0.2548296
      %v813 = vadd.f32 %v811, 0.2548296
      %v814 = vmul.f32 %v812, %v796
      %v815 = vmul.f32 %v813, %v797
      %v816 = vmul.f32 %v814, %v785
      %v817 = vmul.f32 %v815, %v787
      %v818 = vsub.f32 1.0, %v816
      %v819 = vsub.f32 1.0, %v817
      %vm820 = vcmp.ge.f32.partialorder %v778, 0.0
      %vm821 = vcmp.ge.f32.partialorder %v779, 0.0
      %v822 = vsub.f32 0.0, %v818
      %v823 = vsub.f32 0.0, %v819
      %v824 = vsel %vm820, %v818, %v822
      %v825 = vsel %vm821, %v819, %v823
      %v826 = vmul.f32 %v785, 0.3989423
      %v827 = vmul.f32 %v787, 0.3989423
      %v828 = vmul.f32 %v778, 0.5
      %v829 = vmul.f32 %v779, 0.5
      %v830 = vadd.f32 %v824, 1.0
      %v831 = vadd.f32 %v825, 1.0
      %v832 = vmul.f32 %v828, %v830
      %v833 = vmul.f32 %v829, %v831
      %v834 = vadd.f32 %v826, %v832
      %v835 = vadd.f32 %v827, %v833
      %v836 = vstv %s777
      %v837 = vmul.f32 %v836, %v834
      %v838 = vmul.f32 %v836, %v835
      %v839 = vadd.f32 %v769, %v837
      %v840 = vadd.f32 %v770, %v838
      %v841 = vsel %vm221, 1, 0
      %v842 = vsel %vm222, 1, 0
      %843 = vset.pattern.permute.xlu0 0
      %844 = vperm.xlu0 %843, %v841
      %v845 = vpop.permute.xlu0 %844
      %846 = vset.pattern.permute.xlu0 0
      %847 = vperm.xlu0 %846, %v842
      %v848 = vpop.permute.xlu0 %847
      %vm849 = vcmp.eq.s32.totalorder %v845, 1
      %vm850 = vcmp.eq.s32.totalorder %v848, 1
      %v851 = vsel %vm849, %v839, %v187
      %v852 = vsel %vm850, %v840, %v188
      %853 = vst [vmem:[#allocation10] sm:$0xff] %v851
      %854 = vst [vmem:[#allocation10 + $0x8] sm:$0xff] %v852
    $region49: #{tpu_custom_call.1} parent=1 // pred_fallthru
      _
    // Predicated region
    $region50: #{tpu_custom_call.1} parent=1 // pred_check
      _
    $region51: #{tpu_custom_call.1} parent=1 // pred_check_branch
      %856 = sbr.rel (0) target = $region53
    $region52: #{tpu_custom_call.1} parent=1 // pred_region
      %s858 = ssub.s32 256, 256
      %859 = vsyncadd [#allocation7], %s858
      %s860 = sshll.u32 [#allocation10], 4
      %s861 = int_to_ptr.vmem [resolvable:$true] %s860
      %866 = dma.vmem_to_hbm [thread:$0]  %s861, 256, %s10, [#allocation7], 128, 128, 8
    $region53: #{tpu_custom_call.1} parent=1 // pred_fallthru
      _
    // Predicated region
    $region54: #{tpu_custom_call.1} parent=1 // pred_check
      _
    $region55: #{tpu_custom_call.1} parent=1 // pred_check_branch
      %868 = sbr.rel (0) target = $region57
    $region56: #{tpu_custom_call.1} parent=1 // pred_region
      %869 = dma.done [#allocation7], 256
    $region57: #{tpu_custom_call.1} parent=1 // pred_fallthru
      _
    %870 = vsyncpa [#allocation6], 1
    %871 = vsyncpa [#allocation9], 1
    %872 = vsyncpa [#allocation7], 1

</llo_original>
